<compile_context>
chip_gen: v7x
topology: tpu7x:2x2x1
jax: 0.10.0
libtpu: 0.0.40
codegen_flags: <defaults>
</compile_context>

<pallas_src>
import functools

import jax
import jax.numpy as jnp
from jax.experimental import pallas as pl
from jax.experimental.pallas import tpu as pltpu


def generator_kernel(x_ref,
                     w1_ref, b1_ref,
                     w2_ref, b2_ref,
                     w3_ref, b3_ref,
                     w4_ref, b4_ref,
                     out_ref):
    # Fused 4-layer MLP on one (TM, in_pad) batch tile.
    cdt = w1_ref.dtype  # MXU input dtype (f32 or bf16)

    x = x_ref[...].astype(cdt)

    h = jnp.dot(x, w1_ref[...], preferred_element_type=jnp.float32) + b1_ref[...]
    h = jnp.maximum(h, 0.2 * h)                       # LeakyReLU(0.2), f32 VPU

    h = jnp.dot(h.astype(cdt), w2_ref[...],
                preferred_element_type=jnp.float32) + b2_ref[...]
    h = jnp.maximum(h, 0.2 * h)

    h = jnp.dot(h.astype(cdt), w3_ref[...],
                preferred_element_type=jnp.float32) + b3_ref[...]
    h = jnp.maximum(h, 0.2 * h)

    h = jnp.dot(h.astype(cdt), w4_ref[...],
                preferred_element_type=jnp.float32) + b4_ref[...]
    out_ref[...] = jnp.tanh(h)                         # EUP, f32 output


def _round_up(v, m):
    return ((v + m - 1) // m) * m


@functools.partial(jax.jit, static_argnames=("compute_dtype", "tm_max"))
def generator_forward(x, params, *, compute_dtype=jnp.float32, tm_max=512):
    """x: (B, input_dim) float32. params: dict of (in,out) weights + (1,out) biases."""
    B, in_dim = x.shape
    h1 = params["w1"].shape[1]          # 128
    h2 = params["w2"].shape[1]          # 256
    h3 = params["w3"].shape[1]          # 512
    out_dim = params["w4"].shape[1]

    # Lane-dense padding of input / output feature dims (multiples of 128).
    in_pad = _round_up(in_dim, 128)
    out_pad = _round_up(out_dim, 128)

    # Batch tile: multiple of 8 sublanes, capped (sweepable 256-1024).
    TM = min(tm_max, _round_up(B, 8))
    Bp = _round_up(B, TM)

    f32 = jnp.float32
    # Zero-pad x rows (ragged batch) and columns (lane padding).
    xp = jnp.zeros((Bp, in_pad), f32).at[:B, :in_dim].set(x).astype(compute_dtype)

    # Zero-pad weights so padded rows/cols contribute nothing; cast matmul
    # inputs to compute_dtype, keep biases in f32 (f32 accumulation path).
    w1 = jnp.zeros((in_pad, h1), f32).at[:in_dim, :].set(params["w1"]).astype(compute_dtype)
    w2 = params["w2"].astype(compute_dtype)
    w3 = params["w3"].astype(compute_dtype)
    w4 = jnp.zeros((h3, out_pad), f32).at[:, :out_dim].set(params["w4"]).astype(compute_dtype)

    b1 = params["b1"].astype(f32)
    b2 = params["b2"].astype(f32)
    b3 = params["b3"].astype(f32)
    b4 = jnp.zeros((1, out_pad), f32).at[:, :out_dim].set(params["b4"])

    grid = (Bp // TM,)

    # Weights/biases: full-array blocks, constant index_map -> VMEM-resident.
    def resident(arr):
        return pl.BlockSpec(arr.shape, lambda i: tuple(0 for _ in arr.shape))

    in_specs = [
        pl.BlockSpec((TM, in_pad), lambda i: (i, 0)),   # x tile (pipelined)
        resident(w1), resident(b1),
        resident(w2), resident(b2),
        resident(w3), resident(b3),
        resident(w4), resident(b4),
    ]
    out_spec = pl.BlockSpec((TM, out_pad), lambda i: (i, 0))

    # Advisory cost estimate (padded problem).
    flops = 2 * Bp * (in_pad * h1 + h1 * h2 + h2 * h3 + h3 * out_pad)
    transcendentals = Bp * out_pad
    weight_bytes = sum(int(a.size) * a.dtype.itemsize
                       for a in (w1, b1, w2, b2, w3, b3, w4, b4))
    bytes_accessed = (int(xp.size) * xp.dtype.itemsize
                      + Bp * out_pad * 4
                      + weight_bytes)

    out_padded = pl.pallas_call(
        generator_kernel,
        out_shape=jax.ShapeDtypeStruct((Bp, out_pad), jnp.float32),
        grid=grid,
        in_specs=in_specs,
        out_specs=out_spec,
        compiler_params=pltpu.CompilerParams(
            dimension_semantics=("parallel",)),
        cost_estimate=pl.CostEstimate(
            flops=flops,
            transcendentals=transcendentals,
            bytes_accessed=bytes_accessed),
    )(xp, w1, b1, w2, b2, w3, b3, w4, b4)

    return out_padded[:B, :out_dim]


def init_params(key, input_dim, output_dim):
    """Deterministic init mimicking torch.nn.Linear (weights stored as (in,out))."""
    dims = [(input_dim, 128), (128, 256), (256, 512), (512, output_dim)]
    params = {}
    keys = jax.random.split(key, len(dims))
    for i, ((fan_in, fan_out), k) in enumerate(zip(dims, keys), start=1):
        kw, kb = jax.random.split(k)
        bound = 1.0 / jnp.sqrt(fan_in)
        params[f"w{i}"] = jax.random.uniform(
            kw, (fan_in, fan_out), jnp.float32, -bound, bound)
        params[f"b{i}"] = jax.random.uniform(
            kb, (1, fan_out), jnp.float32, -bound, bound)
    return params


def generator_reference(x, params):
    """Pure-JAX f32 reference for correctness check."""
    h = x @ params["w1"] + params["b1"]
    h = jnp.where(h > 0, h, 0.2 * h)
    h = h @ params["w2"] + params["b2"]
    h = jnp.where(h > 0, h, 0.2 * h)
    h = h @ params["w3"] + params["b3"]
    h = jnp.where(h > 0, h, 0.2 * h)
    h = h @ params["w4"] + params["b4"]
    return jnp.tanh(h)


if __name__ == "__main__":
    key = jax.random.PRNGKey(0)
    k_params, k_x = jax.random.split(key)

    B, input_dim, output_dim = 8, 32, 64
    params = init_params(k_params, input_dim, output_dim)
    x = jax.random.normal(k_x, (B, input_dim), dtype=jnp.float32)

    ref = generator_reference(x, params)

    # f32 path: must match the PyTorch/JAX reference tightly.
    out_f32 = jax.block_until_ready(generator_forward(x, params))
    assert out_f32.shape == (B, output_dim), out_f32.shape
    assert jnp.allclose(out_f32, ref, atol=1e-5, rtol=1e-5), "f32 mismatch vs reference"

    # bf16 MXU-input path (f32 accumulation): relaxed tolerance.
    out_bf16 = jax.block_until_ready(
        generator_forward(x, params, compute_dtype=jnp.bfloat16))
    assert out_bf16.shape == (B, output_dim), out_bf16.shape
    assert jnp.allclose(out_bf16, ref, atol=2e-2, rtol=2e-2), "bf16 mismatch vs reference"

    print("KERNEL_OK")
</pallas_src>

<mosaic_0001>
module attributes {stable_mosaic.version = 11 : i64} {
  func.func @generator_kernel(%arg0: i32, %arg1: memref<8x128xf32, #tpu.memory_space<vmem>>, %arg2: memref<128x128xf32, #tpu.memory_space<vmem>>, %arg3: memref<1x128xf32, #tpu.memory_space<vmem>>, %arg4: memref<128x256xf32, #tpu.memory_space<vmem>>, %arg5: memref<1x256xf32, #tpu.memory_space<vmem>>, %arg6: memref<256x512xf32, #tpu.memory_space<vmem>>, %arg7: memref<1x512xf32, #tpu.memory_space<vmem>>, %arg8: memref<512x128xf32, #tpu.memory_space<vmem>>, %arg9: memref<1x128xf32, #tpu.memory_space<vmem>>, %arg10: memref<8x128xf32, #tpu.memory_space<vmem>>) attributes {dimension_semantics = [#tpu.dimension_semantics<parallel>], iteration_bounds = array<i64: 1>, scalar_prefetch = 0 : i64, scratch_operands = 0 : i64, tpu.core_type = #tpu.core_type<tc>, window_params = [{transform_indices = @transform_0, window_bounds = array<i64: 8, 128>}, {pipeline_mode = #tpu.pipeline_mode<synchronous>, transform_indices = @transform_1, window_bounds = array<i64: 128, 128>}, {pipeline_mode = #tpu.pipeline_mode<synchronous>, transform_indices = @transform_2, window_bounds = array<i64: 1, 128>}, {pipeline_mode = #tpu.pipeline_mode<synchronous>, transform_indices = @transform_3, window_bounds = array<i64: 128, 256>}, {pipeline_mode = #tpu.pipeline_mode<synchronous>, transform_indices = @transform_4, window_bounds = array<i64: 1, 256>}, {pipeline_mode = #tpu.pipeline_mode<synchronous>, transform_indices = @transform_5, window_bounds = array<i64: 256, 512>}, {pipeline_mode = #tpu.pipeline_mode<synchronous>, transform_indices = @transform_6, window_bounds = array<i64: 1, 512>}, {pipeline_mode = #tpu.pipeline_mode<synchronous>, transform_indices = @transform_7, window_bounds = array<i64: 512, 128>}, {pipeline_mode = #tpu.pipeline_mode<synchronous>, transform_indices = @transform_8, window_bounds = array<i64: 1, 128>}, {transform_indices = @transform_9, window_bounds = array<i64: 8, 128>}]} {
    %c0 = arith.constant 0 : index
    %c0_0 = arith.constant 0 : index
    %0 = vector.load %arg1[%c0, %c0_0] : memref<8x128xf32, #tpu.memory_space<vmem>>, vector<8x128xf32>
    %c0_1 = arith.constant 0 : index
    %c0_2 = arith.constant 0 : index
    %1 = vector.load %arg2[%c0_1, %c0_2] : memref<128x128xf32, #tpu.memory_space<vmem>>, vector<128x128xf32>
    %cst = arith.constant dense<0.000000e+00> : vector<8x128xf32>
    %2 = tpu.matmul %0, %1, %cst {dimension_numbers = #tpu.dot_dimension_numbers<[1], [0], [0], [1], [0, 0, 1, 1], [], []>} : vector<8x128xf32>, vector<128x128xf32>, vector<8x128xf32> -> vector<8x128xf32>
    %c0_3 = arith.constant 0 : index
    %c0_4 = arith.constant 0 : index
    %3 = vector.load %arg3[%c0_3, %c0_4] : memref<1x128xf32, #tpu.memory_space<vmem>>, vector<1x128xf32>
    %4 = vector.broadcast %3 : vector<1x128xf32> to vector<8x128xf32>
    %5 = arith.addf %2, %4 : vector<8x128xf32>
    %cst_5 = arith.constant 2.000000e-01 : f32
    %6 = vector.broadcast %cst_5 : f32 to vector<8x128xf32>
    %7 = arith.mulf %6, %5 : vector<8x128xf32>
    %8 = arith.maximumf %5, %7 : vector<8x128xf32>
    %c0_6 = arith.constant 0 : index
    %c0_7 = arith.constant 0 : index
    %9 = vector.load %arg4[%c0_6, %c0_7] : memref<128x256xf32, #tpu.memory_space<vmem>>, vector<128x256xf32>
    %cst_8 = arith.constant dense<0.000000e+00> : vector<8x256xf32>
    %10 = tpu.matmul %8, %9, %cst_8 {dimension_numbers = #tpu.dot_dimension_numbers<[1], [0], [0], [1], [0, 0, 1, 1], [], []>} : vector<8x128xf32>, vector<128x256xf32>, vector<8x256xf32> -> vector<8x256xf32>
    %c0_9 = arith.constant 0 : index
    %c0_10 = arith.constant 0 : index
    %11 = vector.load %arg5[%c0_9, %c0_10] : memref<1x256xf32, #tpu.memory_space<vmem>>, vector<1x256xf32>
    %12 = vector.broadcast %11 : vector<1x256xf32> to vector<8x256xf32>
    %13 = arith.addf %10, %12 : vector<8x256xf32>
    %cst_11 = arith.constant 2.000000e-01 : f32
    %14 = vector.broadcast %cst_11 : f32 to vector<8x256xf32>
    %15 = arith.mulf %14, %13 : vector<8x256xf32>
    %16 = arith.maximumf %13, %15 : vector<8x256xf32>
    %c0_12 = arith.constant 0 : index
    %c0_13 = arith.constant 0 : index
    %17 = vector.load %arg6[%c0_12, %c0_13] : memref<256x512xf32, #tpu.memory_space<vmem>>, vector<256x512xf32>
    %cst_14 = arith.constant dense<0.000000e+00> : vector<8x512xf32>
    %18 = tpu.matmul %16, %17, %cst_14 {dimension_numbers = #tpu.dot_dimension_numbers<[1], [0], [0], [1], [0, 0, 1, 1], [], []>} : vector<8x256xf32>, vector<256x512xf32>, vector<8x512xf32> -> vector<8x512xf32>
    %c0_15 = arith.constant 0 : index
    %c0_16 = arith.constant 0 : index
    %19 = vector.load %arg7[%c0_15, %c0_16] : memref<1x512xf32, #tpu.memory_space<vmem>>, vector<1x512xf32>
    %20 = vector.broadcast %19 : vector<1x512xf32> to vector<8x512xf32>
    %21 = arith.addf %18, %20 : vector<8x512xf32>
    %cst_17 = arith.constant 2.000000e-01 : f32
    %22 = vector.broadcast %cst_17 : f32 to vector<8x512xf32>
    %23 = arith.mulf %22, %21 : vector<8x512xf32>
    %24 = arith.maximumf %21, %23 : vector<8x512xf32>
    %c0_18 = arith.constant 0 : index
    %c0_19 = arith.constant 0 : index
    %25 = vector.load %arg8[%c0_18, %c0_19] : memref<512x128xf32, #tpu.memory_space<vmem>>, vector<512x128xf32>
    %cst_20 = arith.constant dense<0.000000e+00> : vector<8x128xf32>
    %26 = tpu.matmul %24, %25, %cst_20 {dimension_numbers = #tpu.dot_dimension_numbers<[1], [0], [0], [1], [0, 0, 1, 1], [], []>} : vector<8x512xf32>, vector<512x128xf32>, vector<8x128xf32> -> vector<8x128xf32>
    %c0_21 = arith.constant 0 : index
    %c0_22 = arith.constant 0 : index
    %27 = vector.load %arg9[%c0_21, %c0_22] : memref<1x128xf32, #tpu.memory_space<vmem>>, vector<1x128xf32>
    %28 = vector.broadcast %27 : vector<1x128xf32> to vector<8x128xf32>
    %29 = arith.addf %26, %28 : vector<8x128xf32>
    %30 = math.tanh %29 : vector<8x128xf32>
    %c0_23 = arith.constant 0 : index
    %c0_24 = arith.constant 0 : index
    %31 = vector.load %arg10[%c0_23, %c0_24] : memref<8x128xf32, #tpu.memory_space<vmem>>, vector<8x128xf32>
    tpu.vector_store %arg10[%c0_23, %c0_24], %30 {strides = array<i32>} : memref<8x128xf32, #tpu.memory_space<vmem>>, vector<8x128xf32>,
    return
  }
  func.func @transform_0(%arg0: i32) -> (i32, i32) {
    %c0_i32 = arith.constant 0 : i32
    %c0_i32_0 = arith.constant 0 : i32
    return %arg0, %c0_i32 : i32, i32
  }
  func.func @transform_1(%arg0: i32) -> (i32, i32) {
    %c0_i32 = arith.constant 0 : i32
    %c0_i32_0 = arith.constant 0 : i32
    %c0_i32_1 = arith.constant 0 : i32
    return %c0_i32, %c0_i32_0 : i32, i32
  }
  func.func @transform_2(%arg0: i32) -> (i32, i32) {
    %c0_i32 = arith.constant 0 : i32
    %c0_i32_0 = arith.constant 0 : i32
    %c0_i32_1 = arith.constant 0 : i32
    return %c0_i32, %c0_i32_0 : i32, i32
  }
  func.func @transform_3(%arg0: i32) -> (i32, i32) {
    %c0_i32 = arith.constant 0 : i32
    %c0_i32_0 = arith.constant 0 : i32
    %c0_i32_1 = arith.constant 0 : i32
    return %c0_i32, %c0_i32_0 : i32, i32
  }
  func.func @transform_4(%arg0: i32) -> (i32, i32) {
    %c0_i32 = arith.constant 0 : i32
    %c0_i32_0 = arith.constant 0 : i32
    %c0_i32_1 = arith.constant 0 : i32
    return %c0_i32, %c0_i32_0 : i32, i32
  }
  func.func @transform_5(%arg0: i32) -> (i32, i32) {
    %c0_i32 = arith.constant 0 : i32
    %c0_i32_0 = arith.constant 0 : i32
    %c0_i32_1 = arith.constant 0 : i32
    return %c0_i32, %c0_i32_0 : i32, i32
  }
  func.func @transform_6(%arg0: i32) -> (i32, i32) {
    %c0_i32 = arith.constant 0 : i32
    %c0_i32_0 = arith.constant 0 : i32
    %c0_i32_1 = arith.constant 0 : i32
    return %c0_i32, %c0_i32_0 : i32, i32
  }
  func.func @transform_7(%arg0: i32) -> (i32, i32) {
    %c0_i32 = arith.constant 0 : i32
    %c0_i32_0 = arith.constant 0 : i32
    %c0_i32_1 = arith.constant 0 : i32
    return %c0_i32, %c0_i32_0 : i32, i32
  }
  func.func @transform_8(%arg0: i32) -> (i32, i32) {
    %c0_i32 = arith.constant 0 : i32
    %c0_i32_0 = arith.constant 0 : i32
    %c0_i32_1 = arith.constant 0 : i32
    return %c0_i32, %c0_i32_0 : i32, i32
  }
  func.func @transform_9(%arg0: i32) -> (i32, i32) {
    %c0_i32 = arith.constant 0 : i32
    %c0_i32_0 = arith.constant 0 : i32
    return %arg0, %c0_i32 : i32, i32
  }
}

</mosaic_0001>

<llo_original>
// kernel: generator_forward.1
$region0: #{generator_forward.1}
  #allocation0 [shape = 'u32[]', space=smem, size = 0x4, offset = 0x4, fixed_abs, tag = 'smem constant byte address 0x4 - core index']
  #allocation1 [shape = 'u32[144,128]{1,0:T(1,128)}', space=vmem, size = 0x12000, scoped, tag = 'internal scratch']
  %s0 = inlined_call_operand.vmem [shape: f32[8,128], index: 0, kind: input, shape index: {}]
  %s1 = inlined_call_operand.vmem [shape: f32[128,128], index: 1, kind: input, shape index: {}]
  %s2 = inlined_call_operand.vmem [shape: f32[1,128], index: 2, kind: input, shape index: {}]
  %s3 = inlined_call_operand.vmem [shape: f32[128,256], index: 3, kind: input, shape index: {}]
  %s4 = inlined_call_operand.vmem [shape: f32[1,256], index: 4, kind: input, shape index: {}]
  %s5 = inlined_call_operand.vmem [shape: f32[256,512], index: 5, kind: input, shape index: {}]
  %s6 = inlined_call_operand.vmem [shape: f32[1,512], index: 6, kind: input, shape index: {}]
  %s7 = inlined_call_operand.vmem [shape: f32[512,128], index: 7, kind: input, shape index: {}]
  %s8 = inlined_call_operand.vmem [shape: f32[1,128], index: 8, kind: input, shape index: {}]
  %s9 = inlined_call_operand.hbm [shape: f32[8,128], index: 9, kind: output, shape index: {}]
  %s10 = sld [smem:[#allocation0]]
  $region46: #{generator_forward.1} parent=0
    _
  %s12 = ssub.s32 1, %s10
  %s13 = scalar_select 0, %s12, %s10
  $region1: #{generator_forward.1} parent=0
    #allocation2 [shape = 'u8[4096]{0}', space=vmem, size = 0x1000, scoped, tag = 'output window, operand 0, single buffered']
    #allocation3 [shape = 's32[1]{0}', space=sflag, size = 0x4, scoped, tag = 'scoped memory for generator_forward.1']
    %14 = vsyncpa [#allocation3], 0
    // Predicated region
    $region2: #{generator_forward.1} parent=1 // pred_check
      _
    $region3: #{generator_forward.1} parent=1 // pred_check_branch
      %16 = sbr.rel (0) target = $region5
    $region4: #{generator_forward.1} parent=1 // pred_region
      _
    $region5: #{generator_forward.1} parent=1 // pred_fallthru
      _
    // Predicated region
    $region6: #{generator_forward.1} parent=1 // pred_check
      _
    $region7: #{generator_forward.1} parent=1 // pred_check_branch
      %18 = sbr.rel (0) target = $region9
    $region8: #{generator_forward.1} parent=1 // pred_region
      _
    $region9: #{generator_forward.1} parent=1 // pred_fallthru
      _
    // Predicated region
    $region10: #{generator_forward.1} parent=1 // pred_check
      _
    $region11: #{generator_forward.1} parent=1 // pred_check_branch
      %20 = sbr.rel (0) target = $region13
    $region12: #{generator_forward.1} parent=1 // pred_region
      _
    $region13: #{generator_forward.1} parent=1 // pred_fallthru
      _
    // Predicated region
    $region14: #{generator_forward.1} parent=1 // pred_check
      _
    $region15: #{generator_forward.1} parent=1 // pred_check_branch
      %22 = sbr.rel (0) target = $region17
    $region16: #{generator_forward.1} parent=1 // pred_region
      _
    $region17: #{generator_forward.1} parent=1 // pred_fallthru
      _
    // Predicated region
    $region18: #{generator_forward.1} parent=1 // pred_check
      _
    $region19: #{generator_forward.1} parent=1 // pred_check_branch
      %24 = sbr.rel (0) target = $region21
    $region20: #{generator_forward.1} parent=1 // pred_region
      _
    $region21: #{generator_forward.1} parent=1 // pred_fallthru
      _
    // Predicated region
    $region22: #{generator_forward.1} parent=1 // pred_check
      _
    $region23: #{generator_forward.1} parent=1 // pred_check_branch
      %26 = sbr.rel (0) target = $region25
    $region24: #{generator_forward.1} parent=1 // pred_region
      _
    $region25: #{generator_forward.1} parent=1 // pred_fallthru
      _
    // Predicated region
    $region26: #{generator_forward.1} parent=1 // pred_check
      _
    $region27: #{generator_forward.1} parent=1 // pred_check_branch
      %28 = sbr.rel (0) target = $region29
    $region28: #{generator_forward.1} parent=1 // pred_region
      _
    $region29: #{generator_forward.1} parent=1 // pred_fallthru
      _
    // Predicated region
    $region30: #{generator_forward.1} parent=1 // pred_check
      _
    $region31: #{generator_forward.1} parent=1 // pred_check_branch
      %30 = sbr.rel (0) target = $region33
    $region32: #{generator_forward.1} parent=1 // pred_region
      _
    $region33: #{generator_forward.1} parent=1 // pred_fallthru
      _
    // Predicated region
    $region34: #{generator_forward.1} parent=1 // pred_check
      _
    $region35: #{generator_forward.1} parent=1 // pred_check_branch
      %32 = sbr.rel (0) target = $region37
    $region36: #{generator_forward.1} parent=1 // pred_region
      _
    $region37: #{generator_forward.1} parent=1 // pred_fallthru
      _
    %v33 = vld [vmem:[%s0] sm:$0xff]
    %v34 = vld [vmem:[%s1] sm:$0xff]
    %v35 = vld [vmem:[%s1 + $0x8] sm:$0xff]
    %v36 = vld [vmem:[%s1 + $0x10] sm:$0xff]
    %v37 = vld [vmem:[%s1 + $0x18] sm:$0xff]
    %v38 = vld [vmem:[%s1 + $0x20] sm:$0xff]
    %v39 = vld [vmem:[%s1 + $0x28] sm:$0xff]
    %v40 = vld [vmem:[%s1 + $0x30] sm:$0xff]
    %v41 = vld [vmem:[%s1 + $0x38] sm:$0xff]
    %v42 = vld [vmem:[%s1 + $0x40] sm:$0xff]
    %v43 = vld [vmem:[%s1 + $0x48] sm:$0xff]
    %v44 = vld [vmem:[%s1 + $0x50] sm:$0xff]
    %v45 = vld [vmem:[%s1 + $0x58] sm:$0xff]
    %v46 = vld [vmem:[%s1 + $0x60] sm:$0xff]
    %v47 = vld [vmem:[%s1 + $0x68] sm:$0xff]
    %v48 = vld [vmem:[%s1 + $0x70] sm:$0xff]
    %v49 = vld [vmem:[%s1 + $0x78] sm:$0xff]
    %v50 = vld [vmem:[%s2] sm:$0x1]
    %v52 = vlaneseq
    %v53 = vshrl.u32 %v52, 7
    %v54 = vsub.s32 0, %v53
    %v55 = vrot.slane %v50, %v54
    %57 = vmatprep.subr.mxu0 0.0
    %58 = vmatpush1.msra.mxu0 %v34
    %59 = vmatprep.subr.mxu0 0.0
    %60 = vmatpush1.msra.mxu0 %v35
    %61 = vmatprep.subr.mxu0 0.0
    %62 = vmatpush1.msra.mxu0 %v36
    %63 = vmatprep.subr.mxu0 0.0
    %64 = vmatpush1.msra.mxu0 %v37
    %65 = vmatprep.subr.mxu0 0.0
    %66 = vmatpush1.msra.mxu0 %v38
    %67 = vmatprep.subr.mxu0 0.0
    %68 = vmatpush1.msra.mxu0 %v39
    %69 = vmatprep.subr.mxu0 0.0
    %70 = vmatpush1.msra.mxu0 %v40
    %71 = vmatprep.subr.mxu0 0.0
    %72 = vmatpush1.msra.mxu0 %v41
    %73 = vmatprep.subr.mxu0 0.0
    %74 = vmatpush1.msra.mxu0 %v42
    %75 = vmatprep.subr.mxu0 0.0
    %76 = vmatpush1.msra.mxu0 %v43
    %77 = vmatprep.subr.mxu0 0.0
    %78 = vmatpush1.msra.mxu0 %v44
    %79 = vmatprep.subr.mxu0 0.0
    %80 = vmatpush1.msra.mxu0 %v45
    %81 = vmatprep.subr.mxu0 0.0
    %82 = vmatpush1.msra.mxu0 %v46
    %83 = vmatprep.subr.mxu0 0.0
    %84 = vmatpush1.msra.mxu0 %v47
    %85 = vmatprep.subr.mxu0 0.0
    %86 = vmatpush1.msra.mxu0 %v48
    %87 = vmatprep.subr.mxu0 0.0
    %88 = vmatpush1.msra.mxu0 %v49
    %89 = vmatprep.subr.mxu0 0.0
    %90 = vmatpush1.msra.mxu0 0.0
    %91 = vmatprep.subr.mxu0 0.0
    %92 = vmatpush1.msra.mxu0 0.0
    %93 = vmatprep.subr.mxu0 0.0
    %94 = vmatpush1.msra.mxu0 0.0
    %95 = vmatprep.subr.mxu0 0.0
    %96 = vmatpush1.msra.mxu0 0.0
    %97 = vmatprep.subr.mxu0 0.0
    %98 = vmatpush1.msra.mxu0 0.0
    %99 = vmatprep.subr.mxu0 0.0
    %100 = vmatpush1.msra.mxu0 0.0
    %101 = vmatprep.subr.mxu0 0.0
    %102 = vmatpush1.msra.mxu0 0.0
    %103 = vmatprep.subr.mxu0 0.0
    %104 = vmatpush1.msra.mxu0 0.0
    %105 = vmatprep.subr.mxu0 0.0
    %106 = vmatpush1.msra.mxu0 0.0
    %107 = vmatprep.subr.mxu0 0.0
    %108 = vmatpush1.msra.mxu0 0.0
    %109 = vmatprep.subr.mxu0 0.0
    %110 = vmatpush1.msra.mxu0 0.0
    %111 = vmatprep.subr.mxu0 0.0
    %112 = vmatpush1.msra.mxu0 0.0
    %113 = vmatprep.subr.mxu0 0.0
    %114 = vmatpush1.msra.mxu0 0.0
    %115 = vmatprep.subr.mxu0 0.0
    %116 = vmatpush1.msra.mxu0 0.0
    %117 = vmatprep.subr.mxu0 0.0
    %118 = vmatpush1.msra.mxu0 0.0
    %119 = vmatprep.subr.mxu0 0.0
    %120 = vmatpush1.msra.mxu0 0.0
    %121 = vmatprep.mubr.f32.mxu0 0.0
    %122 = vmatmul.mubr.f32.gmra.mrb[0].mxu0 %v33
    %v123 = vpop.f32.mrb[0].mxu0
    %v124 = vadd.f32 %v55, %v123
    %v125 = vpop.f32.mrb[0].mxu0
    %126 = vdwg.mxu0
    %v127 = vmul.f32 %v124, 0.2
    %v128 = vmax.f32 %v124, %v127
    %v129 = vld [vmem:[%s3] sm:$0xff]
    %v130 = vld [vmem:[%s3 + $0x8] sm:$0xff]
    %v131 = vld [vmem:[%s3 + $0x10] sm:$0xff]
    %v132 = vld [vmem:[%s3 + $0x18] sm:$0xff]
    %v133 = vld [vmem:[%s3 + $0x20] sm:$0xff]
    %v134 = vld [vmem:[%s3 + $0x28] sm:$0xff]
    %v135 = vld [vmem:[%s3 + $0x30] sm:$0xff]
    %v136 = vld [vmem:[%s3 + $0x38] sm:$0xff]
    %v137 = vld [vmem:[%s3 + $0x40] sm:$0xff]
    %v138 = vld [vmem:[%s3 + $0x48] sm:$0xff]
    %v139 = vld [vmem:[%s3 + $0x50] sm:$0xff]
    %v140 = vld [vmem:[%s3 + $0x58] sm:$0xff]
    %v141 = vld [vmem:[%s3 + $0x60] sm:$0xff]
    %v142 = vld [vmem:[%s3 + $0x68] sm:$0xff]
    %v143 = vld [vmem:[%s3 + $0x70] sm:$0xff]
    %v144 = vld [vmem:[%s3 + $0x78] sm:$0xff]
    %v145 = vld [vmem:[%s3 + $0x80] sm:$0xff]
    %v146 = vld [vmem:[%s3 + $0x88] sm:$0xff]
    %v147 = vld [vmem:[%s3 + $0x90] sm:$0xff]
    %v148 = vld [vmem:[%s3 + $0x98] sm:$0xff]
    %v149 = vld [vmem:[%s3 + $0xa0] sm:$0xff]
    %v150 = vld [vmem:[%s3 + $0xa8] sm:$0xff]
    %v151 = vld [vmem:[%s3 + $0xb0] sm:$0xff]
    %v152 = vld [vmem:[%s3 + $0xb8] sm:$0xff]
    %v153 = vld [vmem:[%s3 + $0xc0] sm:$0xff]
    %v154 = vld [vmem:[%s3 + $0xc8] sm:$0xff]
    %v155 = vld [vmem:[%s3 + $0xd0] sm:$0xff]
    %v156 = vld [vmem:[%s3 + $0xd8] sm:$0xff]
    %v157 = vld [vmem:[%s3 + $0xe0] sm:$0xff]
    %v158 = vld [vmem:[%s3 + $0xe8] sm:$0xff]
    %v159 = vld [vmem:[%s3 + $0xf0] sm:$0xff]
    %v160 = vld [vmem:[%s3 + $0xf8] sm:$0xff]
    %v161 = vld [vmem:[%s4] sm:$0x3]
    %v163 = vlaneseq
    %v164 = vshrl.u32 %v163, 7
    %v165 = vsub.s32 0, %v164
    %v166 = vrot.slane %v161, %v165
    %v167 = vlaneseq
    %v168 = vshrl.u32 %v167, 7
    %v169 = vsub.s32 1, %v168
    %v170 = vrot.slane %v161, %v169
    %173 = vmatprep.subr.mxu0 %v130
    %174 = vmatpush1.msra.mxu0 %v129
    %175 = vmatprep.subr.mxu0 %v132
    %176 = vmatpush1.msra.mxu0 %v131
    %177 = vmatprep.subr.mxu0 %v134
    %178 = vmatpush1.msra.mxu0 %v133
    %179 = vmatprep.subr.mxu0 %v136
    %180 = vmatpush1.msra.mxu0 %v135
    %181 = vmatprep.subr.mxu0 %v138
    %182 = vmatpush1.msra.mxu0 %v137
    %183 = vmatprep.subr.mxu0 %v140
    %184 = vmatpush1.msra.mxu0 %v139
    %185 = vmatprep.subr.mxu0 %v142
    %186 = vmatpush1.msra.mxu0 %v141
    %187 = vmatprep.subr.mxu0 %v144
    %188 = vmatpush1.msra.mxu0 %v143
    %189 = vmatprep.subr.mxu0 %v146
    %190 = vmatpush1.msra.mxu0 %v145
    %191 = vmatprep.subr.mxu0 %v148
    %192 = vmatpush1.msra.mxu0 %v147
    %193 = vmatprep.subr.mxu0 %v150
    %194 = vmatpush1.msra.mxu0 %v149
    %195 = vmatprep.subr.mxu0 %v152
    %196 = vmatpush1.msra.mxu0 %v151
    %197 = vmatprep.subr.mxu0 %v154
    %198 = vmatpush1.msra.mxu0 %v153
    %199 = vmatprep.subr.mxu0 %v156
    %200 = vmatpush1.msra.mxu0 %v155
    %201 = vmatprep.subr.mxu0 %v158
    %202 = vmatpush1.msra.mxu0 %v157
    %203 = vmatprep.subr.mxu0 %v160
    %204 = vmatpush1.msra.mxu0 %v159
    %205 = vmatprep.subr.mxu0 0.0
    %206 = vmatpush1.msra.mxu0 0.0
    %207 = vmatprep.subr.mxu0 0.0
    %208 = vmatpush1.msra.mxu0 0.0
    %209 = vmatprep.subr.mxu0 0.0
    %210 = vmatpush1.msra.mxu0 0.0
    %211 = vmatprep.subr.mxu0 0.0
    %212 = vmatpush1.msra.mxu0 0.0
    %213 = vmatprep.subr.mxu0 0.0
    %214 = vmatpush1.msra.mxu0 0.0
    %215 = vmatprep.subr.mxu0 0.0
    %216 = vmatpush1.msra.mxu0 0.0
    %217 = vmatprep.subr.mxu0 0.0
    %218 = vmatpush1.msra.mxu0 0.0
    %219 = vmatprep.subr.mxu0 0.0
    %220 = vmatpush1.msra.mxu0 0.0
    %221 = vmatprep.subr.mxu0 0.0
    %222 = vmatpush1.msra.mxu0 0.0
    %223 = vmatprep.subr.mxu0 0.0
    %224 = vmatpush1.msra.mxu0 0.0
    %225 = vmatprep.subr.mxu0 0.0
    %226 = vmatpush1.msra.mxu0 0.0
    %227 = vmatprep.subr.mxu0 0.0
    %228 = vmatpush1.msra.mxu0 0.0
    %229 = vmatprep.subr.mxu0 0.0
    %230 = vmatpush1.msra.mxu0 0.0
    %231 = vmatprep.subr.mxu0 0.0
    %232 = vmatpush1.msra.mxu0 0.0
    %233 = vmatprep.subr.mxu0 0.0
    %234 = vmatpush1.msra.mxu0 0.0
    %235 = vmatprep.subr.mxu0 0.0
    %236 = vmatpush1.msra.mxu0 0.0
    %237 = vmatprep.mubr.f32.mxu0 0.0
    %238 = vmatmul.mubr.f32.gmra.mrb[0].mxu0 %v128
    %v239 = vpop.f32.mrb[0].mxu0
    %v240 = vadd.f32 %v166, %v239
    %v241 = vpop.f32.mrb[0].mxu0
    %v242 = vadd.f32 %v170, %v241
    %243 = vdwg.mxu0
    %v244 = vmul.f32 %v240, 0.2
    %v245 = vmul.f32 %v242, 0.2
    %v246 = vmax.f32 %v240, %v244
    %v247 = vmax.f32 %v242, %v245
    %v248 = vld [vmem:[%s5] sm:$0xff]
    %v249 = vld [vmem:[%s5 + $0x8] sm:$0xff]
    %v250 = vld [vmem:[%s5 + $0x10] sm:$0xff]
    %v251 = vld [vmem:[%s5 + $0x18] sm:$0xff]
    %v252 = vld [vmem:[%s5 + $0x20] sm:$0xff]
    %v253 = vld [vmem:[%s5 + $0x28] sm:$0xff]
    %v254 = vld [vmem:[%s5 + $0x30] sm:$0xff]
    %v255 = vld [vmem:[%s5 + $0x38] sm:$0xff]
    %v256 = vld [vmem:[%s5 + $0x40] sm:$0xff]
    %v257 = vld [vmem:[%s5 + $0x48] sm:$0xff]
    %v258 = vld [vmem:[%s5 + $0x50] sm:$0xff]
    %v259 = vld [vmem:[%s5 + $0x58] sm:$0xff]
    %v260 = vld [vmem:[%s5 + $0x60] sm:$0xff]
    %v261 = vld [vmem:[%s5 + $0x68] sm:$0xff]
    %v262 = vld [vmem:[%s5 + $0x70] sm:$0xff]
    %v263 = vld [vmem:[%s5 + $0x78] sm:$0xff]
    %v264 = vld [vmem:[%s5 + $0x80] sm:$0xff]
    %v265 = vld [vmem:[%s5 + $0x88] sm:$0xff]
    %v266 = vld [vmem:[%s5 + $0x90] sm:$0xff]
    %v267 = vld [vmem:[%s5 + $0x98] sm:$0xff]
    %v268 = vld [vmem:[%s5 + $0xa0] sm:$0xff]
    %v269 = vld [vmem:[%s5 + $0xa8] sm:$0xff]
    %v270 = vld [vmem:[%s5 + $0xb0] sm:$0xff]
    %v271 = vld [vmem:[%s5 + $0xb8] sm:$0xff]
    %v272 = vld [vmem:[%s5 + $0xc0] sm:$0xff]
    %v273 = vld [vmem:[%s5 + $0xc8] sm:$0xff]
    %v274 = vld [vmem:[%s5 + $0xd0] sm:$0xff]
    %v275 = vld [vmem:[%s5 + $0xd8] sm:$0xff]
    %v276 = vld [vmem:[%s5 + $0xe0] sm:$0xff]
    %v277 = vld [vmem:[%s5 + $0xe8] sm:$0xff]
    %v278 = vld [vmem:[%s5 + $0xf0] sm:$0xff]
    %v279 = vld [vmem:[%s5 + $0xf8] sm:$0xff]
    %v280 = vld [vmem:[%s5 + $0x100] sm:$0xff]
    %v281 = vld [vmem:[%s5 + $0x108] sm:$0xff]
    %v282 = vld [vmem:[%s5 + $0x110] sm:$0xff]
    %v283 = vld [vmem:[%s5 + $0x118] sm:$0xff]
    %v284 = vld [vmem:[%s5 + $0x120] sm:$0xff]
    %v285 = vld [vmem:[%s5 + $0x128] sm:$0xff]
    %v286 = vld [vmem:[%s5 + $0x130] sm:$0xff]
    %v287 = vld [vmem:[%s5 + $0x138] sm:$0xff]
    %v288 = vld [vmem:[%s5 + $0x140] sm:$0xff]
    %v289 = vld [vmem:[%s5 + $0x148] sm:$0xff]
    %v290 = vld [vmem:[%s5 + $0x150] sm:$0xff]
    %v291 = vld [vmem:[%s5 + $0x158] sm:$0xff]
    %v292 = vld [vmem:[%s5 + $0x160] sm:$0xff]
    %v293 = vld [vmem:[%s5 + $0x168] sm:$0xff]
    %v294 = vld [vmem:[%s5 + $0x170] sm:$0xff]
    %v295 = vld [vmem:[%s5 + $0x178] sm:$0xff]
    %v296 = vld [vmem:[%s5 + $0x180] sm:$0xff]
    %v297 = vld [vmem:[%s5 + $0x188] sm:$0xff]
    %v298 = vld [vmem:[%s5 + $0x190] sm:$0xff]
    %v299 = vld [vmem:[%s5 + $0x198] sm:$0xff]
    %v300 = vld [vmem:[%s5 + $0x1a0] sm:$0xff]
    %v301 = vld [vmem:[%s5 + $0x1a8] sm:$0xff]
    %v302 = vld [vmem:[%s5 + $0x1b0] sm:$0xff]
    %v303 = vld [vmem:[%s5 + $0x1b8] sm:$0xff]
    %v304 = vld [vmem:[%s5 + $0x1c0] sm:$0xff]
    %v305 = vld [vmem:[%s5 + $0x1c8] sm:$0xff]
    %v306 = vld [vmem:[%s5 + $0x1d0] sm:$0xff]
    %v307 = vld [vmem:[%s5 + $0x1d8] sm:$0xff]
    %v308 = vld [vmem:[%s5 + $0x1e0] sm:$0xff]
    %v309 = vld [vmem:[%s5 + $0x1e8] sm:$0xff]
    %v310 = vld [vmem:[%s5 + $0x1f0] sm:$0xff]
    %v311 = vld [vmem:[%s5 + $0x1f8] sm:$0xff]
    %v312 = vld [vmem:[%s5 + $0x200] sm:$0xff]
    %v313 = vld [vmem:[%s5 + $0x208] sm:$0xff]
    %v314 = vld [vmem:[%s5 + $0x210] sm:$0xff]
    %v315 = vld [vmem:[%s5 + $0x218] sm:$0xff]
    %v316 = vld [vmem:[%s5 + $0x220] sm:$0xff]
    %v317 = vld [vmem:[%s5 + $0x228] sm:$0xff]
    %v318 = vld [vmem:[%s5 + $0x230] sm:$0xff]
    %v319 = vld [vmem:[%s5 + $0x238] sm:$0xff]
    %v320 = vld [vmem:[%s5 + $0x240] sm:$0xff]
    %v321 = vld [vmem:[%s5 + $0x248] sm:$0xff]
    %v322 = vld [vmem:[%s5 + $0x250] sm:$0xff]
    %v323 = vld [vmem:[%s5 + $0x258] sm:$0xff]
    %v324 = vld [vmem:[%s5 + $0x260] sm:$0xff]
    %v325 = vld [vmem:[%s5 + $0x268] sm:$0xff]
    %v326 = vld [vmem:[%s5 + $0x270] sm:$0xff]
    %v327 = vld [vmem:[%s5 + $0x278] sm:$0xff]
    %v328 = vld [vmem:[%s5 + $0x280] sm:$0xff]
    %v329 = vld [vmem:[%s5 + $0x288] sm:$0xff]
    %v330 = vld [vmem:[%s5 + $0x290] sm:$0xff]
    %v331 = vld [vmem:[%s5 + $0x298] sm:$0xff]
    %v332 = vld [vmem:[%s5 + $0x2a0] sm:$0xff]
    %v333 = vld [vmem:[%s5 + $0x2a8] sm:$0xff]
    %v334 = vld [vmem:[%s5 + $0x2b0] sm:$0xff]
    %v335 = vld [vmem:[%s5 + $0x2b8] sm:$0xff]
    %v336 = vld [vmem:[%s5 + $0x2c0] sm:$0xff]
    %v337 = vld [vmem:[%s5 + $0x2c8] sm:$0xff]
    %v338 = vld [vmem:[%s5 + $0x2d0] sm:$0xff]
    %v339 = vld [vmem:[%s5 + $0x2d8] sm:$0xff]
    %v340 = vld [vmem:[%s5 + $0x2e0] sm:$0xff]
    %v341 = vld [vmem:[%s5 + $0x2e8] sm:$0xff]
    %v342 = vld [vmem:[%s5 + $0x2f0] sm:$0xff]
    %v343 = vld [vmem:[%s5 + $0x2f8] sm:$0xff]
    %v344 = vld [vmem:[%s5 + $0x300] sm:$0xff]
    %v345 = vld [vmem:[%s5 + $0x308] sm:$0xff]
    %v346 = vld [vmem:[%s5 + $0x310] sm:$0xff]
    %v347 = vld [vmem:[%s5 + $0x318] sm:$0xff]
    %v348 = vld [vmem:[%s5 + $0x320] sm:$0xff]
    %v349 = vld [vmem:[%s5 + $0x328] sm:$0xff]
    %v350 = vld [vmem:[%s5 + $0x330] sm:$0xff]
    %v351 = vld [vmem:[%s5 + $0x338] sm:$0xff]
    %v352 = vld [vmem:[%s5 + $0x340] sm:$0xff]
    %v353 = vld [vmem:[%s5 + $0x348] sm:$0xff]
    %v354 = vld [vmem:[%s5 + $0x350] sm:$0xff]
    %v355 = vld [vmem:[%s5 + $0x358] sm:$0xff]
    %v356 = vld [vmem:[%s5 + $0x360] sm:$0xff]
    %v357 = vld [vmem:[%s5 + $0x368] sm:$0xff]
    %v358 = vld [vmem:[%s5 + $0x370] sm:$0xff]
    %v359 = vld [vmem:[%s5 + $0x378] sm:$0xff]
    %v360 = vld [vmem:[%s5 + $0x380] sm:$0xff]
    %v361 = vld [vmem:[%s5 + $0x388] sm:$0xff]
    %v362 = vld [vmem:[%s5 + $0x390] sm:$0xff]
    %v363 = vld [vmem:[%s5 + $0x398] sm:$0xff]
    %v364 = vld [vmem:[%s5 + $0x3a0] sm:$0xff]
    %v365 = vld [vmem:[%s5 + $0x3a8] sm:$0xff]
    %v366 = vld [vmem:[%s5 + $0x3b0] sm:$0xff]
    %v367 = vld [vmem:[%s5 + $0x3b8] sm:$0xff]
    %v368 = vld [vmem:[%s5 + $0x3c0] sm:$0xff]
    %v369 = vld [vmem:[%s5 + $0x3c8] sm:$0xff]
    %v370 = vld [vmem:[%s5 + $0x3d0] sm:$0xff]
    %v371 = vld [vmem:[%s5 + $0x3d8] sm:$0xff]
    %v372 = vld [vmem:[%s5 + $0x3e0] sm:$0xff]
    %v373 = vld [vmem:[%s5 + $0x3e8] sm:$0xff]
    %v374 = vld [vmem:[%s5 + $0x3f0] sm:$0xff]
    %v375 = vld [vmem:[%s5 + $0x3f8] sm:$0xff]
    %v376 = vld [vmem:[%s6] sm:$0xf]
    %v378 = vlaneseq
    %v379 = vshrl.u32 %v378, 7
    %v380 = vsub.s32 0, %v379
    %v381 = vrot.slane %v376, %v380
    %v382 = vlaneseq
    %v383 = vshrl.u32 %v382, 7
    %v384 = vsub.s32 1, %v383
    %v385 = vrot.slane %v376, %v384
    %v386 = vlaneseq
    %v387 = vshrl.u32 %v386, 7
    %v388 = vsub.s32 2, %v387
    %v389 = vrot.slane %v376, %v388
    %v390 = vlaneseq
    %v391 = vshrl.u32 %v390, 7
    %v392 = vsub.s32 3, %v391
    %v393 = vrot.slane %v376, %v392
    %398 = vmatprep.subr.mxu0 %v249
    %399 = vmatpush1.msra.mxu0 %v248
    %400 = vmatprep.subr.mxu0 %v253
    %401 = vmatpush1.msra.mxu0 %v252
    %402 = vmatprep.subr.mxu0 %v257
    %403 = vmatpush1.msra.mxu0 %v256
    %404 = vmatprep.subr.mxu0 %v261
    %405 = vmatpush1.msra.mxu0 %v260
    %406 = vmatprep.subr.mxu0 %v265
    %407 = vmatpush1.msra.mxu0 %v264
    %408 = vmatprep.subr.mxu0 %v269
    %409 = vmatpush1.msra.mxu0 %v268
    %410 = vmatprep.subr.mxu0 %v273
    %411 = vmatpush1.msra.mxu0 %v272
    %412 = vmatprep.subr.mxu0 %v277
    %413 = vmatpush1.msra.mxu0 %v276
    %414 = vmatprep.subr.mxu0 %v281
    %415 = vmatpush1.msra.mxu0 %v280
    %416 = vmatprep.subr.mxu0 %v285
    %417 = vmatpush1.msra.mxu0 %v284
    %418 = vmatprep.subr.mxu0 %v289
    %419 = vmatpush1.msra.mxu0 %v288
    %420 = vmatprep.subr.mxu0 %v293
    %421 = vmatpush1.msra.mxu0 %v292
    %422 = vmatprep.subr.mxu0 %v297
    %423 = vmatpush1.msra.mxu0 %v296
    %424 = vmatprep.subr.mxu0 %v301
    %425 = vmatpush1.msra.mxu0 %v300
    %426 = vmatprep.subr.mxu0 %v305
    %427 = vmatpush1.msra.mxu0 %v304
    %428 = vmatprep.subr.mxu0 %v309
    %429 = vmatpush1.msra.mxu0 %v308
    %430 = vmatprep.subr.mxu0 %v313
    %431 = vmatpush1.msra.mxu0 %v312
    %432 = vmatprep.subr.mxu0 %v317
    %433 = vmatpush1.msra.mxu0 %v316
    %434 = vmatprep.subr.mxu0 %v321
    %435 = vmatpush1.msra.mxu0 %v320
    %436 = vmatprep.subr.mxu0 %v325
    %437 = vmatpush1.msra.mxu0 %v324
    %438 = vmatprep.subr.mxu0 %v329
    %439 = vmatpush1.msra.mxu0 %v328
    %440 = vmatprep.subr.mxu0 %v333
    %441 = vmatpush1.msra.mxu0 %v332
    %442 = vmatprep.subr.mxu0 %v337
    %443 = vmatpush1.msra.mxu0 %v336
    %444 = vmatprep.subr.mxu0 %v341
    %445 = vmatpush1.msra.mxu0 %v340
    %446 = vmatprep.subr.mxu0 %v345
    %447 = vmatpush1.msra.mxu0 %v344
    %448 = vmatprep.subr.mxu0 %v349
    %449 = vmatpush1.msra.mxu0 %v348
    %450 = vmatprep.subr.mxu0 %v353
    %451 = vmatpush1.msra.mxu0 %v352
    %452 = vmatprep.subr.mxu0 %v357
    %453 = vmatpush1.msra.mxu0 %v356
    %454 = vmatprep.subr.mxu0 %v361
    %455 = vmatpush1.msra.mxu0 %v360
    %456 = vmatprep.subr.mxu0 %v365
    %457 = vmatpush1.msra.mxu0 %v364
    %458 = vmatprep.subr.mxu0 %v369
    %459 = vmatpush1.msra.mxu0 %v368
    %460 = vmatprep.subr.mxu0 %v373
    %461 = vmatpush1.msra.mxu0 %v372
    %462 = vmatprep.mubr.f32.mxu0 %v247
    %463 = vmatmul.mubr.f32.gmra.mrb[0].mxu0 %v246
    %v464 = vpop.f32.mrb[0].mxu0
    %v465 = vadd.f32 %v381, %v464
    %v466 = vpop.f32.mrb[0].mxu0
    %v467 = vadd.f32 %v385, %v466
    %468 = vdwg.mxu0
    %469 = vmatprep.subr.mxu0 %v251
    %470 = vmatpush1.msra.mxu0 %v250
    %471 = vmatprep.subr.mxu0 %v255
    %472 = vmatpush1.msra.mxu0 %v254
    %473 = vmatprep.subr.mxu0 %v259
    %474 = vmatpush1.msra.mxu0 %v258
    %475 = vmatprep.subr.mxu0 %v263
    %476 = vmatpush1.msra.mxu0 %v262
    %477 = vmatprep.subr.mxu0 %v267
    %478 = vmatpush1.msra.mxu0 %v266
    %479 = vmatprep.subr.mxu0 %v271
    %480 = vmatpush1.msra.mxu0 %v270
    %481 = vmatprep.subr.mxu0 %v275
    %482 = vmatpush1.msra.mxu0 %v274
    %483 = vmatprep.subr.mxu0 %v279
    %484 = vmatpush1.msra.mxu0 %v278
    %485 = vmatprep.subr.mxu0 %v283
    %486 = vmatpush1.msra.mxu0 %v282
    %487 = vmatprep.subr.mxu0 %v287
    %488 = vmatpush1.msra.mxu0 %v286
    %489 = vmatprep.subr.mxu0 %v291
    %490 = vmatpush1.msra.mxu0 %v290
    %491 = vmatprep.subr.mxu0 %v295
    %492 = vmatpush1.msra.mxu0 %v294
    %493 = vmatprep.subr.mxu0 %v299
    %494 = vmatpush1.msra.mxu0 %v298
    %495 = vmatprep.subr.mxu0 %v303
    %496 = vmatpush1.msra.mxu0 %v302
    %497 = vmatprep.subr.mxu0 %v307
    %498 = vmatpush1.msra.mxu0 %v306
    %499 = vmatprep.subr.mxu0 %v311
    %500 = vmatpush1.msra.mxu0 %v310
    %501 = vmatprep.subr.mxu0 %v315
    %502 = vmatpush1.msra.mxu0 %v314
    %503 = vmatprep.subr.mxu0 %v319
    %504 = vmatpush1.msra.mxu0 %v318
    %505 = vmatprep.subr.mxu0 %v323
    %506 = vmatpush1.msra.mxu0 %v322
    %507 = vmatprep.subr.mxu0 %v327
    %508 = vmatpush1.msra.mxu0 %v326
    %509 = vmatprep.subr.mxu0 %v331
    %510 = vmatpush1.msra.mxu0 %v330
    %511 = vmatprep.subr.mxu0 %v335
    %512 = vmatpush1.msra.mxu0 %v334
    %513 = vmatprep.subr.mxu0 %v339
    %514 = vmatpush1.msra.mxu0 %v338
    %515 = vmatprep.subr.mxu0 %v343
    %516 = vmatpush1.msra.mxu0 %v342
    %517 = vmatprep.subr.mxu0 %v347
    %518 = vmatpush1.msra.mxu0 %v346
    %519 = vmatprep.subr.mxu0 %v351
    %520 = vmatpush1.msra.mxu0 %v350
    %521 = vmatprep.subr.mxu0 %v355
    %522 = vmatpush1.msra.mxu0 %v354
    %523 = vmatprep.subr.mxu0 %v359
    %524 = vmatpush1.msra.mxu0 %v358
    %525 = vmatprep.subr.mxu0 %v363
    %526 = vmatpush1.msra.mxu0 %v362
    %527 = vmatprep.subr.mxu0 %v367
    %528 = vmatpush1.msra.mxu0 %v366
    %529 = vmatprep.subr.mxu0 %v371
    %530 = vmatpush1.msra.mxu0 %v370
    %531 = vmatprep.subr.mxu0 %v375
    %532 = vmatpush1.msra.mxu0 %v374
    %533 = vmatprep.mubr.f32.mxu0 %v247
    %534 = vmatmul.mubr.f32.gmra.mrb[0].mxu0 %v246
    %v535 = vpop.f32.mrb[0].mxu0
    %v536 = vadd.f32 %v389, %v535
    %v537 = vpop.f32.mrb[0].mxu0
    %v538 = vadd.f32 %v393, %v537
    %539 = vdwg.mxu0
    %v540 = vmul.f32 %v465, 0.2
    %v541 = vmul.f32 %v467, 0.2
    %v542 = vmul.f32 %v536, 0.2
    %v543 = vmul.f32 %v538, 0.2
    %v544 = vmax.f32 %v465, %v540
    %v545 = vmax.f32 %v467, %v541
    %v546 = vmax.f32 %v536, %v542
    %v547 = vmax.f32 %v538, %v543
    %v548 = vld [vmem:[%s7] sm:$0xff]
    %v549 = vld [vmem:[%s7 + $0x8] sm:$0xff]
    %v550 = vld [vmem:[%s7 + $0x10] sm:$0xff]
    %v551 = vld [vmem:[%s7 + $0x18] sm:$0xff]
    %v552 = vld [vmem:[%s7 + $0x20] sm:$0xff]
    %v553 = vld [vmem:[%s7 + $0x28] sm:$0xff]
    %v554 = vld [vmem:[%s7 + $0x30] sm:$0xff]
    %v555 = vld [vmem:[%s7 + $0x38] sm:$0xff]
    %v556 = vld [vmem:[%s7 + $0x40] sm:$0xff]
    %v557 = vld [vmem:[%s7 + $0x48] sm:$0xff]
    %v558 = vld [vmem:[%s7 + $0x50] sm:$0xff]
    %v559 = vld [vmem:[%s7 + $0x58] sm:$0xff]
    %v560 = vld [vmem:[%s7 + $0x60] sm:$0xff]
    %v561 = vld [vmem:[%s7 + $0x68] sm:$0xff]
    %v562 = vld [vmem:[%s7 + $0x70] sm:$0xff]
    %v563 = vld [vmem:[%s7 + $0x78] sm:$0xff]
    %v564 = vld [vmem:[%s7 + $0x80] sm:$0xff]
    %v565 = vld [vmem:[%s7 + $0x88] sm:$0xff]
    %v566 = vld [vmem:[%s7 + $0x90] sm:$0xff]
    %v567 = vld [vmem:[%s7 + $0x98] sm:$0xff]
    %v568 = vld [vmem:[%s7 + $0xa0] sm:$0xff]
    %v569 = vld [vmem:[%s7 + $0xa8] sm:$0xff]
    %v570 = vld [vmem:[%s7 + $0xb0] sm:$0xff]
    %v571 = vld [vmem:[%s7 + $0xb8] sm:$0xff]
    %v572 = vld [vmem:[%s7 + $0xc0] sm:$0xff]
    %v573 = vld [vmem:[%s7 + $0xc8] sm:$0xff]
    %v574 = vld [vmem:[%s7 + $0xd0] sm:$0xff]
    %v575 = vld [vmem:[%s7 + $0xd8] sm:$0xff]
    %v576 = vld [vmem:[%s7 + $0xe0] sm:$0xff]
    %v577 = vld [vmem:[%s7 + $0xe8] sm:$0xff]
    %v578 = vld [vmem:[%s7 + $0xf0] sm:$0xff]
    %v579 = vld [vmem:[%s7 + $0xf8] sm:$0xff]
    %v580 = vld [vmem:[%s7 + $0x100] sm:$0xff]
    %v581 = vld [vmem:[%s7 + $0x108] sm:$0xff]
    %v582 = vld [vmem:[%s7 + $0x110] sm:$0xff]
    %v583 = vld [vmem:[%s7 + $0x118] sm:$0xff]
    %v584 = vld [vmem:[%s7 + $0x120] sm:$0xff]
    %v585 = vld [vmem:[%s7 + $0x128] sm:$0xff]
    %v586 = vld [vmem:[%s7 + $0x130] sm:$0xff]
    %v587 = vld [vmem:[%s7 + $0x138] sm:$0xff]
    %v588 = vld [vmem:[%s7 + $0x140] sm:$0xff]
    %v589 = vld [vmem:[%s7 + $0x148] sm:$0xff]
    %v590 = vld [vmem:[%s7 + $0x150] sm:$0xff]
    %v591 = vld [vmem:[%s7 + $0x158] sm:$0xff]
    %v592 = vld [vmem:[%s7 + $0x160] sm:$0xff]
    %v593 = vld [vmem:[%s7 + $0x168] sm:$0xff]
    %v594 = vld [vmem:[%s7 + $0x170] sm:$0xff]
    %v595 = vld [vmem:[%s7 + $0x178] sm:$0xff]
    %v596 = vld [vmem:[%s7 + $0x180] sm:$0xff]
    %v597 = vld [vmem:[%s7 + $0x188] sm:$0xff]
    %v598 = vld [vmem:[%s7 + $0x190] sm:$0xff]
    %v599 = vld [vmem:[%s7 + $0x198] sm:$0xff]
    %v600 = vld [vmem:[%s7 + $0x1a0] sm:$0xff]
    %v601 = vld [vmem:[%s7 + $0x1a8] sm:$0xff]
    %v602 = vld [vmem:[%s7 + $0x1b0] sm:$0xff]
    %v603 = vld [vmem:[%s7 + $0x1b8] sm:$0xff]
    %v604 = vld [vmem:[%s7 + $0x1c0] sm:$0xff]
    %v605 = vld [vmem:[%s7 + $0x1c8] sm:$0xff]
    %v606 = vld [vmem:[%s7 + $0x1d0] sm:$0xff]
    %v607 = vld [vmem:[%s7 + $0x1d8] sm:$0xff]
    %v608 = vld [vmem:[%s7 + $0x1e0] sm:$0xff]
    %v609 = vld [vmem:[%s7 + $0x1e8] sm:$0xff]
    %v610 = vld [vmem:[%s7 + $0x1f0] sm:$0xff]
    %v611 = vld [vmem:[%s7 + $0x1f8] sm:$0xff]
    %v612 = vld [vmem:[%s8] sm:$0x1]
    %v614 = vlaneseq
    %v615 = vshrl.u32 %v614, 7
    %v616 = vsub.s32 0, %v615
    %v617 = vrot.slane %v612, %v616
    %619 = vmatprep.subr.mxu0 0.0
    %620 = vmatpush1.msra.mxu0 %v548
    %621 = vmatprep.subr.mxu0 0.0
    %622 = vmatpush1.msra.mxu0 %v549
    %623 = vmatprep.subr.mxu0 0.0
    %624 = vmatpush1.msra.mxu0 %v550
    %625 = vmatprep.subr.mxu0 0.0
    %626 = vmatpush1.msra.mxu0 %v551
    %627 = vmatprep.subr.mxu0 0.0
    %628 = vmatpush1.msra.mxu0 %v552
    %629 = vmatprep.subr.mxu0 0.0
    %630 = vmatpush1.msra.mxu0 %v553
    %631 = vmatprep.subr.mxu0 0.0
    %632 = vmatpush1.msra.mxu0 %v554
    %633 = vmatprep.subr.mxu0 0.0
    %634 = vmatpush1.msra.mxu0 %v555
    %635 = vmatprep.subr.mxu0 0.0
    %636 = vmatpush1.msra.mxu0 %v556
    %637 = vmatprep.subr.mxu0 0.0
    %638 = vmatpush1.msra.mxu0 %v557
    %639 = vmatprep.subr.mxu0 0.0
    %640 = vmatpush1.msra.mxu0 %v558
    %641 = vmatprep.subr.mxu0 0.0
    %642 = vmatpush1.msra.mxu0 %v559
    %643 = vmatprep.subr.mxu0 0.0
    %644 = vmatpush1.msra.mxu0 %v560
    %645 = vmatprep.subr.mxu0 0.0
    %646 = vmatpush1.msra.mxu0 %v561
    %647 = vmatprep.subr.mxu0 0.0
    %648 = vmatpush1.msra.mxu0 %v562
    %649 = vmatprep.subr.mxu0 0.0
    %650 = vmatpush1.msra.mxu0 %v563
    %651 = vmatprep.subr.mxu0 0.0
    %652 = vmatpush1.msra.mxu0 %v564
    %653 = vmatprep.subr.mxu0 0.0
    %654 = vmatpush1.msra.mxu0 %v565
    %655 = vmatprep.subr.mxu0 0.0
    %656 = vmatpush1.msra.mxu0 %v566
    %657 = vmatprep.subr.mxu0 0.0
    %658 = vmatpush1.msra.mxu0 %v567
    %659 = vmatprep.subr.mxu0 0.0
    %660 = vmatpush1.msra.mxu0 %v568
    %661 = vmatprep.subr.mxu0 0.0
    %662 = vmatpush1.msra.mxu0 %v569
    %663 = vmatprep.subr.mxu0 0.0
    %664 = vmatpush1.msra.mxu0 %v570
    %665 = vmatprep.subr.mxu0 0.0
    %666 = vmatpush1.msra.mxu0 %v571
    %667 = vmatprep.subr.mxu0 0.0
    %668 = vmatpush1.msra.mxu0 %v572
    %669 = vmatprep.subr.mxu0 0.0
    %670 = vmatpush1.msra.mxu0 %v573
    %671 = vmatprep.subr.mxu0 0.0
    %672 = vmatpush1.msra.mxu0 %v574
    %673 = vmatprep.subr.mxu0 0.0
    %674 = vmatpush1.msra.mxu0 %v575
    %675 = vmatprep.subr.mxu0 0.0
    %676 = vmatpush1.msra.mxu0 %v576
    %677 = vmatprep.subr.mxu0 0.0
    %678 = vmatpush1.msra.mxu0 %v577
    %679 = vmatprep.subr.mxu0 0.0
    %680 = vmatpush1.msra.mxu0 %v578
    %681 = vmatprep.subr.mxu0 0.0
    %682 = vmatpush1.msra.mxu0 %v579
    %683 = vmatprep.mubr.f32.mxu0 %v545
    %684 = vmatmul.mubr.f32.gmra.mrb[0].mxu0 %v544
    %v685 = vpop.f32.mrb[0].mxu0
    %v686 = vadd.f32 %v617, %v685
    %v687 = vpop.f32.mrb[0].mxu0
    %688 = vdwg.mxu0
    %689 = vmatprep.subr.mxu0 0.0
    %690 = vmatpush1.msra.mxu0 %v580
    %691 = vmatprep.subr.mxu0 0.0
    %692 = vmatpush1.msra.mxu0 %v581
    %693 = vmatprep.subr.mxu0 0.0
    %694 = vmatpush1.msra.mxu0 %v582
    %695 = vmatprep.subr.mxu0 0.0
    %696 = vmatpush1.msra.mxu0 %v583
    %697 = vmatprep.subr.mxu0 0.0
    %698 = vmatpush1.msra.mxu0 %v584
    %699 = vmatprep.subr.mxu0 0.0
    %700 = vmatpush1.msra.mxu0 %v585
    %701 = vmatprep.subr.mxu0 0.0
    %702 = vmatpush1.msra.mxu0 %v586
    %703 = vmatprep.subr.mxu0 0.0
    %704 = vmatpush1.msra.mxu0 %v587
    %705 = vmatprep.subr.mxu0 0.0
    %706 = vmatpush1.msra.mxu0 %v588
    %707 = vmatprep.subr.mxu0 0.0
    %708 = vmatpush1.msra.mxu0 %v589
    %709 = vmatprep.subr.mxu0 0.0
    %710 = vmatpush1.msra.mxu0 %v590
    %711 = vmatprep.subr.mxu0 0.0
    %712 = vmatpush1.msra.mxu0 %v591
    %713 = vmatprep.subr.mxu0 0.0
    %714 = vmatpush1.msra.mxu0 %v592
    %715 = vmatprep.subr.mxu0 0.0
    %716 = vmatpush1.msra.mxu0 %v593
    %717 = vmatprep.subr.mxu0 0.0
    %718 = vmatpush1.msra.mxu0 %v594
    %719 = vmatprep.subr.mxu0 0.0
    %720 = vmatpush1.msra.mxu0 %v595
    %721 = vmatprep.subr.mxu0 0.0
    %722 = vmatpush1.msra.mxu0 %v596
    %723 = vmatprep.subr.mxu0 0.0
    %724 = vmatpush1.msra.mxu0 %v597
    %725 = vmatprep.subr.mxu0 0.0
    %726 = vmatpush1.msra.mxu0 %v598
    %727 = vmatprep.subr.mxu0 0.0
    %728 = vmatpush1.msra.mxu0 %v599
    %729 = vmatprep.subr.mxu0 0.0
    %730 = vmatpush1.msra.mxu0 %v600
    %731 = vmatprep.subr.mxu0 0.0
    %732 = vmatpush1.msra.mxu0 %v601
    %733 = vmatprep.subr.mxu0 0.0
    %734 = vmatpush1.msra.mxu0 %v602
    %735 = vmatprep.subr.mxu0 0.0
    %736 = vmatpush1.msra.mxu0 %v603
    %737 = vmatprep.subr.mxu0 0.0
    %738 = vmatpush1.msra.mxu0 %v604
    %739 = vmatprep.subr.mxu0 0.0
    %740 = vmatpush1.msra.mxu0 %v605
    %741 = vmatprep.subr.mxu0 0.0
    %742 = vmatpush1.msra.mxu0 %v606
    %743 = vmatprep.subr.mxu0 0.0
    %744 = vmatpush1.msra.mxu0 %v607
    %745 = vmatprep.subr.mxu0 0.0
    %746 = vmatpush1.msra.mxu0 %v608
    %747 = vmatprep.subr.mxu0 0.0
    %748 = vmatpush1.msra.mxu0 %v609
    %749 = vmatprep.subr.mxu0 0.0
    %750 = vmatpush1.msra.mxu0 %v610
    %751 = vmatprep.subr.mxu0 0.0
    %752 = vmatpush1.msra.mxu0 %v611
    %753 = vmatprep.mubr.f32.mxu0 %v547
    %754 = vmatmul.mubr.f32.gmra.mrb[0].mxu0 %v546
    %v755 = vpop.f32.mrb[0].mxu0
    %v756 = vadd.f32 %v686, %v755
    %v757 = vpop.f32.mrb[0].mxu0
    %758 = vdwg.mxu0
    %v759 = vtanh.pop %v756
    %760 = vst [vmem:[#allocation2] sm:$0xff] %v759
    // Predicated region
    $region38: #{generator_forward.1} parent=1 // pred_check
      _
    $region39: #{generator_forward.1} parent=1 // pred_check_branch
      %762 = sbr.rel (0) target = $region41
    $region40: #{generator_forward.1} parent=1 // pred_region
      %s764 = ssub.s32 128, 128
      %765 = vsyncadd [#allocation3], %s764
      %s767 = sshll.u32 [#allocation2], 4
      %s768 = int_to_ptr.vmem [resolvable:$true] %s767
      %770 = dma.vmem_to_hbm [thread:$0]  %s768, 128, %s9, [#allocation3]
    $region41: #{generator_forward.1} parent=1 // pred_fallthru
      _
    // Predicated region
    $region42: #{generator_forward.1} parent=1 // pred_check
      _
    $region43: #{generator_forward.1} parent=1 // pred_check_branch
      %772 = sbr.rel (0) target = $region45
    $region44: #{generator_forward.1} parent=1 // pred_region
      %773 = dma.done [#allocation3], 128
    $region45: #{generator_forward.1} parent=1 // pred_fallthru
      _
    %774 = vsyncpa [#allocation3], 1

</llo_original>
